<compile_context>
chip_gen: v7x
topology: tpu7x:2x2x1
jax: 0.10.0
libtpu: 0.0.40
codegen_flags: <defaults>
</compile_context>

<pallas_src>
import jax
import jax.numpy as jnp
from jax.experimental import pallas as pl
from jax.experimental.pallas import tpu as pltpu

_LANE = 128
_SUBLANE = 8
_MAX_LANES = 1024            # cap block lane width (4 KiB/row for f32)
_MIN_TILE_BYTES = 2 << 20    # floor if the VMEM query is unavailable/odd


# --------------------------------------------------------------------------
# True forward pass (what the PyTorch module actually does).
# --------------------------------------------------------------------------
def identity(x: jax.Array) -> jax.Array:
    """Identity forward pass: return the input unchanged (zero cost)."""
    return x


# --------------------------------------------------------------------------
# Kernel bodies.
# --------------------------------------------------------------------------
def _vmem_copy_kernel(x_ref, o_ref):
    # Pass-through copy of the current VMEM tile (full-width stores).
    o_ref[...] = x_ref[...]


def _hbm_copy_kernel(x_hbm, o_hbm, sem):
    # Direct HBM->HBM copy: one DMA, no VMEM round-trip, no grid.
    cp = pltpu.make_async_copy(x_hbm, o_hbm, sem)
    cp.start()
    cp.wait()


# --------------------------------------------------------------------------
# Helpers.
# --------------------------------------------------------------------------
def _vmem_capacity_bytes() -> int:
    """Per-core VMEM capacity; conservative fallback if the query fails."""
    try:
        return int(pltpu.get_tpu_info().vmem_capacity_bytes)
    except Exception:
        return 64 << 20  # v7x per-TC VMEM (smallest of the supported chips)


def _choose_2d_view(total: int) -> tuple[int, int]:
    """Lane-dense (rows, cols) factorization; requires total % 128 == 0."""
    cols = _LANE
    while cols * 2 <= _MAX_LANES and total % (cols * 2) == 0:
        cols *= 2
    return total // cols, cols


def _choose_tile_rows(rows: int, cols: int, itemsize: int, tile_bytes: int,
                      max_tile_rows: int | None) -> int:
    bytes_per_row = max(1, cols * itemsize)
    budget = max(1, tile_bytes // bytes_per_row)
    if max_tile_rows is not None:
        budget = max(1, min(budget, max_tile_rows))
    # Guarantee >=2 grid steps when rows allow it, so the pipeline is real
    # and v7x's two TensorCores can both stream the copy.
    if rows >= 2 * _SUBLANE:
        budget = min(budget, rows // 2)
    if rows <= budget:
        return rows
    tile = max(_SUBLANE, (budget // _SUBLANE) * _SUBLANE)
    return min(tile, rows)  # never exceed the full extent (rows < 8 case)


def _cost_estimate(total: int, itemsize: int) -> pl.CostEstimate:
    return pl.CostEstimate(flops=0, transcendentals=0,
                           bytes_accessed=2 * total * itemsize)


# --------------------------------------------------------------------------
# Materialized-copy paths.
# --------------------------------------------------------------------------
def _identity_copy_dma(x: jax.Array) -> jax.Array:
    orig_shape = x.shape
    xr = x.reshape((1,)) if x.ndim == 0 else x
    itemsize = jnp.dtype(x.dtype).itemsize
    out = pl.pallas_call(
        _hbm_copy_kernel,
        out_shape=jax.ShapeDtypeStruct(xr.shape, x.dtype),
        in_specs=[pl.BlockSpec(memory_space=pl.ANY)],
        out_specs=pl.BlockSpec(memory_space=pl.ANY),
        scratch_shapes=[pltpu.SemaphoreType.DMA],
        cost_estimate=_cost_estimate(int(x.size), itemsize),
    )(xr)
    return out.reshape(orig_shape)


def _identity_copy_tiled(x: jax.Array, *,
                         max_tile_rows: int | None = None) -> jax.Array:
    orig_shape = x.shape
    dtype = x.dtype
    total = int(x.size)
    itemsize = jnp.dtype(dtype).itemsize

    rows, cols = _choose_2d_view(total)
    x2d = x.reshape(rows, cols)

    vmem_cap = _vmem_capacity_bytes()
    # ~VMEM/8 per tile => 4x (in+out, double-buffered) uses ~half of VMEM.
    tile_bytes = max(_MIN_TILE_BYTES, vmem_cap // 8)
    tile_rows = _choose_tile_rows(rows, cols, itemsize, tile_bytes,
                                  max_tile_rows)
    grid_rows = pl.cdiv(rows, tile_rows)

    # Raise the scoped-VMEM limit enough for 4x tile + headroom, but stay
    # well under physical VMEM (matters on v5e's 16 MiB default scope and
    # v7x's 64 MiB physical).
    vmem_limit = int(min(vmem_cap * 3 // 4, 4 * tile_bytes + (8 << 20)))

    out2d = pl.pallas_call(
        _vmem_copy_kernel,
        out_shape=jax.ShapeDtypeStruct((rows, cols), dtype),
        grid_spec=pl.GridSpec(
            grid=(grid_rows,),
            in_specs=[pl.BlockSpec((tile_rows, cols), lambda i: (i, 0))],
            out_specs=pl.BlockSpec((tile_rows, cols), lambda i: (i, 0)),
        ),
        compiler_params=pltpu.CompilerParams(
            dimension_semantics=("parallel",),
            vmem_limit_bytes=vmem_limit,
        ),
        cost_estimate=_cost_estimate(total, itemsize),
    )(x2d)
    return out2d.reshape(orig_shape)


def identity_copy(x: jax.Array, *, method: str = "dma",
                  max_tile_rows: int | None = None) -> jax.Array:
    """Materialized identity copy via a Pallas TPU kernel.

    method="dma"  : gridless HBM->HBM async copy (default; roofline, any shape)
    method="tiled": pipelined lane-dense VMEM copy (odd sizes fall back to DMA)
    """
    if int(x.size) == 0:
        return x  # nothing to copy
    if method == "dma":
        return _identity_copy_dma(x)
    if method == "tiled":
        if int(x.size) % _LANE != 0:
            # Avoid the un-pipelined (1, total) block (8x sublane padding,
            # VMEM blow-up on v7x); the DMA path handles any shape.
            return _identity_copy_dma(x)
        return _identity_copy_tiled(x, max_tile_rows=max_tile_rows)
    raise ValueError(f"unknown method: {method!r}")


# --------------------------------------------------------------------------
# Self-test.
# --------------------------------------------------------------------------
if __name__ == "__main__":
    key = jax.random.PRNGKey(0)
    k0, k1, k2 = jax.random.split(key, 3)

    # 1) Module-sized NCHW input: true identity + both copy paths.
    x = jax.random.normal(k0, (2, 4, 16, 16), dtype=jnp.float32)
    y_pass = identity(x)
    y_dma = jax.block_until_ready(identity_copy(x))                    # DMA path
    y_til = jax.block_until_ready(identity_copy(x, method="tiled"))    # VMEM path
    assert y_pass.shape == x.shape and y_pass.dtype == x.dtype
    assert y_dma.shape == x.shape and y_dma.dtype == x.dtype
    assert y_til.shape == x.shape and y_til.dtype == x.dtype
    assert bool(jnp.array_equal(y_pass, x))
    assert bool(jnp.array_equal(y_dma, x))
    assert bool(jnp.array_equal(y_til, x))

    # 2) Multi-block pipelined grid (forced small tile).
    x2 = jax.random.normal(k1, (2, 4, 32, 128), dtype=jnp.float32)
    y2 = jax.block_until_ready(
        identity_copy(x2, method="tiled", max_tile_rows=8))
    assert y2.shape == x2.shape and y2.dtype == x2.dtype
    assert bool(jnp.array_equal(y2, x2))

    # 3) bf16 input through both paths.
    x3 = jax.random.normal(k2, (2, 4, 16, 16), dtype=jnp.bfloat16)
    y3a = jax.block_until_ready(identity_copy(x3))
    y3b = jax.block_until_ready(identity_copy(x3, method="tiled"))
    assert y3a.shape == x3.shape and y3a.dtype == x3.dtype
    assert y3b.shape == x3.shape and y3b.dtype == x3.dtype
    assert bool(jnp.array_equal(y3a, x3))
    assert bool(jnp.array_equal(y3b, x3))

    # 4) Odd element count (not a multiple of 128) -> DMA path (also when
    #    "tiled" is requested, which routes odd totals to DMA).
    x4 = jax.random.normal(k0, (3, 5, 7), dtype=jnp.float32)
    y4a = jax.block_until_ready(identity_copy(x4))
    y4b = jax.block_until_ready(identity_copy(x4, method="tiled"))
    assert y4a.shape == x4.shape and y4a.dtype == x4.dtype
    assert bool(jnp.array_equal(y4a, x4))
    assert bool(jnp.array_equal(y4b, x4))

    print("KERNEL_OK")
</pallas_src>

<mosaic_0001>
module attributes {stable_mosaic.version = 11 : i64} {
  func.func @_hbm_copy_kernel(%arg0: memref<2x4x16x16xf32, #tpu.memory_space<any>>, %arg1: memref<2x4x16x16xf32, #tpu.memory_space<any>>, %arg2: memref<!tpu.dma_semaphore, #tpu.memory_space<semaphore_mem>>) attributes {dimension_semantics = [], scalar_prefetch = 0 : i64, scratch_operands = 1 : i64, tpu.core_type = #tpu.core_type<tc>} {
    tpu.enqueue_dma source(%arg0 : memref<2x4x16x16xf32, #tpu.memory_space<any>>) target(%arg1 : memref<2x4x16x16xf32, #tpu.memory_space<any>>) target_semaphore(%arg2 : memref<!tpu.dma_semaphore, #tpu.memory_space<semaphore_mem>>)
    tpu.wait_dma2 semaphore(%arg2 : memref<!tpu.dma_semaphore, #tpu.memory_space<semaphore_mem>>) src(%arg0 : memref<2x4x16x16xf32, #tpu.memory_space<any>>) dst(%arg1 : memref<2x4x16x16xf32, #tpu.memory_space<any>>)
    return
  }
}

</mosaic_0001>

<llo_original>
// kernel: tpu_custom_call.1
$region0: #{tpu_custom_call.1}
  #allocation0 [shape = 'u32[]', space=smem, size = 0x4, offset = 0x4, fixed_abs, tag = 'smem constant byte address 0x4 - core index']
  #allocation1 [shape = 'u32[144,128]{1,0:T(1,128)}', space=vmem, size = 0x12000, scoped, tag = 'internal scratch']
  #allocation2 [shape = 's32[1]{0}', space=sflag, size = 0x4, scoped, tag = 'scratch operand']
  #allocation3 [shape = 's32[]', space=sflag, size = 0x4, offset = 0, fixed_abs, tag = 'sflag constant byte address 0x0 - dummy sync flag']
  #allocation4 [shape = 'u32[0]{0}', space=smem, size = 0, offset = 0, fixed_abs, tag = 'smem constant byte address 0x0 - null']
  %s0 = inlined_call_operand.hbm [shape: f32[2,4,16,16], index: 0, kind: input, shape index: {}]
  %s1 = inlined_call_operand.hbm [shape: f32[2,4,16,16], index: 1, kind: output, shape index: {}]
  %s2 = sld [smem:[#allocation0]]
  $region2: #{tpu_custom_call.1} parent=0
    _
  %s4 = ssub.s32 1, %s2
  %s5 = scalar_select 0, %s4, %s2
  %s7 = sshll.u32 1, 14
  %s8 = sxor.u32 4294967295, %s7
  %s11 = sshll.u32 3, 24
  %s12 = sxor.u32 4294967295, %s11
  %s13 = sand.u32 0, %s12
  %s15 = sor.u32 %s13, 0
  %18 = dma.general %s0, 2048, %s1, [#allocation2], [#allocation3], [#allocation4], %s15, 0
  %s19 = smul.u32 2, 4
  %s20 = smul.u32 %s19, 16
  %s21 = smul.u32 %s20, 1
  %s22 = sshll.u32 %s21, 4
  %23 = dma.done [#allocation2], %s22
  %24 = vsyncmov [#allocation2]
  %s25 = vpop.sfrf %24
  %p26 = scmp.eq.s32.totalorder %s25, 0
  %p27 = pneg %p26
  %29 = shalt.err (%p27)

</llo_original>
